<compile_context>
chip_gen: v7x
topology: tpu7x:2x2x1
jax: 0.10.0
libtpu: 0.0.40
codegen_flags: <defaults>
</compile_context>

<pallas_src>
import math

import jax
import jax.numpy as jnp
from jax.experimental import pallas as pl
from jax.experimental.pallas import tpu as pltpu

LANE = 128


def _round_up(n, m):
    return ((n + m - 1) // m) * m


def gru_cell_kernel(x_ref, h_ref, wx_ref, whzr_ref, wn_ref, bzr_ref, bn_ref,
                    out_ref):
    hp = out_ref.shape[-1]                 # padded hidden width (multiple of 128)
    cdt = wx_ref.dtype                     # matmul compute dtype (bf16 or f32)

    x = x_ref[...]                         # (tb, I), already in compute dtype
    h32 = h_ref[...].astype(jnp.float32)   # (tb, Hp), f32 for gating / blend

    # x-side contributions of all three gates: one wide MXU matmul.
    gx = jnp.dot(x, wx_ref[...], preferred_element_type=jnp.float32)        # (tb, 3*Hp)
    # z/r hidden-side contributions fused into one matmul.
    ghzr = jnp.dot(h32.astype(cdt), whzr_ref[...],
                   preferred_element_type=jnp.float32)                      # (tb, 2*Hp)

    zr = jax.nn.sigmoid(gx[:, :2 * hp] + ghzr + bzr_ref[...])
    z = zr[:, :hp]
    r = zr[:, hp:]

    # Candidate state: reset applied to h BEFORE the hidden matmul (spec semantics).
    rh = (r * h32).astype(cdt)
    n = jnp.tanh(gx[:, 2 * hp:]
                 + jnp.dot(rh, wn_ref[...], preferred_element_type=jnp.float32)
                 + bn_ref[...])

    # h' = (1 - z) * h + z * n  ==  h + z * (n - h)
    out_ref[...] = (h32 + z * (n - h32)).astype(out_ref.dtype)


def init_params(key, input_size, hidden_size):
    """Mimic the PyTorch module: three nn.Linear(I+H, H) layers, default init."""
    fan_in = input_size + hidden_size
    k = 1.0 / math.sqrt(fan_in)
    keys = jax.random.split(key, 6)
    params = {}
    for idx, name in enumerate(("z", "r", "n")):
        w = jax.random.uniform(keys[2 * idx], (hidden_size, fan_in),
                               jnp.float32, -k, k)
        b = jax.random.uniform(keys[2 * idx + 1], (hidden_size,),
                               jnp.float32, -k, k)
        wt = w.T                                     # (I+H, H)
        params[f"w{name}_x"] = wt[:input_size, :]    # (I, H)
        params[f"w{name}_h"] = wt[input_size:, :]    # (H, H)
        params[f"b{name}"] = b                       # (H,)
    return params


def pack_params(params, input_size, hidden_size, compute_dtype=jnp.bfloat16):
    """Fuse gate weights and zero-pad the hidden width to a multiple of 128 lanes."""
    I, H = input_size, hidden_size
    Hp = _round_up(H, LANE)
    f32 = jnp.float32

    wx = jnp.zeros((I, 3 * Hp), f32)
    wx = wx.at[:, 0:H].set(params["wz_x"])
    wx = wx.at[:, Hp:Hp + H].set(params["wr_x"])
    wx = wx.at[:, 2 * Hp:2 * Hp + H].set(params["wn_x"])

    whzr = jnp.zeros((Hp, 2 * Hp), f32)
    whzr = whzr.at[:H, 0:H].set(params["wz_h"])
    whzr = whzr.at[:H, Hp:Hp + H].set(params["wr_h"])

    wn = jnp.zeros((Hp, Hp), f32).at[:H, :H].set(params["wn_h"])

    bzr = jnp.zeros((1, 2 * Hp), f32)
    bzr = bzr.at[0, 0:H].set(params["bz"]).at[0, Hp:Hp + H].set(params["br"])
    bn = jnp.zeros((1, Hp), f32).at[0, 0:H].set(params["bn"])

    return {
        "wx": wx.astype(compute_dtype),
        "whzr": whzr.astype(compute_dtype),
        "wn": wn.astype(compute_dtype),
        "bzr": bzr,                    # biases stay f32 (added to f32 accum)
        "bn": bn,
        "hidden_size": H,
        "padded_hidden": Hp,
        "compute_dtype": compute_dtype,
    }


def gru_cell(x, h, packed, *, batch_tile=256):
    """x: (B, I), h: (B, H). packed: output of pack_params. Returns (B, H) f32."""
    # TODO(synk): if this cell is driven over a sequence, move the time loop
    # inside the kernel (grid axis over T, h kept in VMEM scratch, weights
    # resident) to amortize per-call overhead and h HBM round-trips.
    B, I = x.shape
    H = packed["hidden_size"]
    Hp = packed["padded_hidden"]
    cdt = packed["compute_dtype"]
    assert h.shape == (B, H)

    # h stays f32 (exact gating/blend); pad its lane axis to Hp. x is matmul-only
    # so it is passed directly in the (bf16) compute dtype to halve its DMA.
    h32 = h.astype(jnp.float32)
    if Hp != H:
        h32 = jnp.pad(h32, ((0, 0), (0, Hp - H)))
    xc = x.astype(cdt)

    tb = B if B <= batch_tile else batch_tile
    grid = (pl.cdiv(B, tb),)

    row_spec = lambda shape: pl.BlockSpec(shape, lambda i: (i, 0))
    const_spec = lambda shape: pl.BlockSpec(shape, lambda i: (0, 0))

    in_specs = [
        row_spec((tb, I)),            # x tile (pipelined)
        row_spec((tb, Hp)),           # h tile (pipelined)
        const_spec((I, 3 * Hp)),      # fused x-side weights (resident)
        const_spec((Hp, 2 * Hp)),     # fused z/r hidden weights (resident)
        const_spec((Hp, Hp)),         # candidate hidden weights (resident)
        const_spec((1, 2 * Hp)),      # fused z/r bias
        const_spec((1, Hp)),          # candidate bias
    ]
    out_specs = row_spec((tb, Hp))

    # Rough VMEM budget; only raise the scoped limit when actually needed and
    # never above v7x's 64 MiB physical VMEM.
    isz = lambda dt: jnp.dtype(dt).itemsize
    weight_bytes = (I * 3 * Hp + Hp * 2 * Hp + Hp * Hp) * isz(cdt) + 3 * Hp * 4
    tile_bytes = 2 * (tb * I * isz(cdt) + 2 * tb * Hp * 4)   # double-buffered x/h/out
    scratch_bytes = 6 * tb * Hp * 4                          # f32 gate intermediates
    vmem_needed = weight_bytes + tile_bytes + scratch_bytes

    cp = {"dimension_semantics": ("parallel",)}              # v7x: shard tiles over 2 TCs
    if vmem_needed > 30 * 2**20:
        cp["vmem_limit_bytes"] = int(min(vmem_needed * 5 // 4, 64 * 2**20))

    out_padded = pl.pallas_call(
        gru_cell_kernel,
        out_shape=jax.ShapeDtypeStruct((B, Hp), jnp.float32),
        grid=grid,
        in_specs=in_specs,
        out_specs=out_specs,
        compiler_params=pltpu.CompilerParams(**cp),
    )(xc, h32, packed["wx"], packed["whzr"], packed["wn"],
      packed["bzr"], packed["bn"])

    return out_padded[:, :H] if Hp != H else out_padded


def gru_cell_reference(x, h, params, compute_dtype=jnp.float32):
    """Pure-JAX reference, same math as the PyTorch module, same matmul precision
    as the kernel when compute_dtype matches."""
    cdt = compute_dtype
    f32 = jnp.float32
    dot = lambda a, b: jnp.dot(a.astype(cdt), b.astype(cdt),
                               preferred_element_type=f32)
    h32 = h.astype(f32)
    z = jax.nn.sigmoid(dot(x, params["wz_x"]) + dot(h, params["wz_h"]) + params["bz"])
    r = jax.nn.sigmoid(dot(x, params["wr_x"]) + dot(h, params["wr_h"]) + params["br"])
    rh = (r * h32).astype(cdt)
    n = jnp.tanh(dot(x, params["wn_x"])
                 + jnp.dot(rh, params["wn_h"].astype(cdt), preferred_element_type=f32)
                 + params["bn"])
    return (1.0 - z) * h32 + z * n


if __name__ == "__main__":
    B, I, H = 8, 16, 32

    key = jax.random.PRNGKey(0)
    kx, kh, kp = jax.random.split(key, 3)
    x = jax.random.normal(kx, (B, I), jnp.float32)
    h = jax.random.normal(kh, (B, H), jnp.float32)
    params = init_params(kp, I, H)

    # 1) Semantics check: f32 compute path vs f32 reference.
    packed_f32 = pack_params(params, I, H, compute_dtype=jnp.float32)
    out_f32 = jax.block_until_ready(gru_cell(x, h, packed_f32))
    ref_f32 = gru_cell_reference(x, h, params, compute_dtype=jnp.float32)
    assert out_f32.shape == (B, H)
    assert jnp.allclose(out_f32, ref_f32, atol=1e-4, rtol=1e-4), "f32 kernel mismatch"

    # 2) Fast path: bf16 MXU matmuls with f32 accumulation.
    packed_bf16 = pack_params(params, I, H, compute_dtype=jnp.bfloat16)
    out_bf16 = jax.block_until_ready(gru_cell(x, h, packed_bf16))
    ref_bf16 = gru_cell_reference(x, h, params, compute_dtype=jnp.bfloat16)
    assert jnp.allclose(out_bf16, ref_bf16, atol=2e-3, rtol=2e-3), "bf16 kernel mismatch"
    assert jnp.allclose(out_bf16, ref_f32, atol=3e-2, rtol=3e-2), "bf16 drift vs f32 semantics"

    print("KERNEL_OK")
</pallas_src>

<mosaic_0001>
module attributes {stable_mosaic.version = 11 : i64} {
  func.func @gru_cell_kernel(%arg0: i32, %arg1: memref<8x16xf32, #tpu.memory_space<vmem>>, %arg2: memref<8x128xf32, #tpu.memory_space<vmem>>, %arg3: memref<16x384xf32, #tpu.memory_space<vmem>>, %arg4: memref<128x256xf32, #tpu.memory_space<vmem>>, %arg5: memref<128x128xf32, #tpu.memory_space<vmem>>, %arg6: memref<1x256xf32, #tpu.memory_space<vmem>>, %arg7: memref<1x128xf32, #tpu.memory_space<vmem>>, %arg8: memref<8x128xf32, #tpu.memory_space<vmem>>) attributes {dimension_semantics = [#tpu.dimension_semantics<parallel>], iteration_bounds = array<i64: 1>, scalar_prefetch = 0 : i64, scratch_operands = 0 : i64, tpu.core_type = #tpu.core_type<tc>, window_params = [{transform_indices = @transform_0, window_bounds = array<i64: 8, 16>}, {transform_indices = @transform_1, window_bounds = array<i64: 8, 128>}, {pipeline_mode = #tpu.pipeline_mode<synchronous>, transform_indices = @transform_2, window_bounds = array<i64: 16, 384>}, {pipeline_mode = #tpu.pipeline_mode<synchronous>, transform_indices = @transform_3, window_bounds = array<i64: 128, 256>}, {pipeline_mode = #tpu.pipeline_mode<synchronous>, transform_indices = @transform_4, window_bounds = array<i64: 128, 128>}, {pipeline_mode = #tpu.pipeline_mode<synchronous>, transform_indices = @transform_5, window_bounds = array<i64: 1, 256>}, {pipeline_mode = #tpu.pipeline_mode<synchronous>, transform_indices = @transform_6, window_bounds = array<i64: 1, 128>}, {transform_indices = @transform_7, window_bounds = array<i64: 8, 128>}]} {
    %c0 = arith.constant 0 : index
    %c0_0 = arith.constant 0 : index
    %0 = vector.load %arg1[%c0, %c0_0] : memref<8x16xf32, #tpu.memory_space<vmem>>, vector<8x16xf32>
    %c0_1 = arith.constant 0 : index
    %c0_2 = arith.constant 0 : index
    %1 = vector.load %arg2[%c0_1, %c0_2] : memref<8x128xf32, #tpu.memory_space<vmem>>, vector<8x128xf32>
    %c0_3 = arith.constant 0 : index
    %c0_4 = arith.constant 0 : index
    %2 = vector.load %arg3[%c0_3, %c0_4] : memref<16x384xf32, #tpu.memory_space<vmem>>, vector<16x384xf32>
    %cst = arith.constant dense<0.000000e+00> : vector<8x384xf32>
    %3 = tpu.matmul %0, %2, %cst {dimension_numbers = #tpu.dot_dimension_numbers<[1], [0], [0], [1], [0, 0, 1, 1], [], []>} : vector<8x16xf32>, vector<16x384xf32>, vector<8x384xf32> -> vector<8x384xf32>
    %c0_5 = arith.constant 0 : index
    %c0_6 = arith.constant 0 : index
    %4 = vector.load %arg4[%c0_5, %c0_6] : memref<128x256xf32, #tpu.memory_space<vmem>>, vector<128x256xf32>
    %cst_7 = arith.constant dense<0.000000e+00> : vector<8x256xf32>
    %5 = tpu.matmul %1, %4, %cst_7 {dimension_numbers = #tpu.dot_dimension_numbers<[1], [0], [0], [1], [0, 0, 1, 1], [], []>} : vector<8x128xf32>, vector<128x256xf32>, vector<8x256xf32> -> vector<8x256xf32>
    %6 = vector.extract_strided_slice %3 {offsets = [0, 0], sizes = [8, 256], strides = [1, 1]} : vector<8x384xf32> to vector<8x256xf32>
    %7 = arith.addf %6, %5 : vector<8x256xf32>
    %c0_8 = arith.constant 0 : index
    %c0_9 = arith.constant 0 : index
    %8 = vector.load %arg6[%c0_8, %c0_9] : memref<1x256xf32, #tpu.memory_space<vmem>>, vector<1x256xf32>
    %9 = vector.broadcast %8 : vector<1x256xf32> to vector<8x256xf32>
    %10 = arith.addf %7, %9 : vector<8x256xf32>
    %11 = arith.negf %10 : vector<8x256xf32>
    %12 = math.exp %11 : vector<8x256xf32>
    %cst_10 = arith.constant 1.000000e+00 : f32
    %13 = vector.broadcast %cst_10 : f32 to vector<8x256xf32>
    %14 = arith.addf %13, %12 : vector<8x256xf32>
    %15 = arith.divf %13, %14 : vector<8x256xf32>
    %16 = vector.extract_strided_slice %15 {offsets = [0, 0], sizes = [8, 128], strides = [1, 1]} : vector<8x256xf32> to vector<8x128xf32>
    %17 = vector.extract_strided_slice %15 {offsets = [0, 128], sizes = [8, 128], strides = [1, 1]} : vector<8x256xf32> to vector<8x128xf32>
    %18 = arith.mulf %17, %1 : vector<8x128xf32>
    %19 = vector.extract_strided_slice %3 {offsets = [0, 256], sizes = [8, 128], strides = [1, 1]} : vector<8x384xf32> to vector<8x128xf32>
    %c0_11 = arith.constant 0 : index
    %c0_12 = arith.constant 0 : index
    %20 = vector.load %arg5[%c0_11, %c0_12] : memref<128x128xf32, #tpu.memory_space<vmem>>, vector<128x128xf32>
    %cst_13 = arith.constant dense<0.000000e+00> : vector<8x128xf32>
    %21 = tpu.matmul %18, %20, %cst_13 {dimension_numbers = #tpu.dot_dimension_numbers<[1], [0], [0], [1], [0, 0, 1, 1], [], []>} : vector<8x128xf32>, vector<128x128xf32>, vector<8x128xf32> -> vector<8x128xf32>
    %22 = arith.addf %19, %21 : vector<8x128xf32>
    %c0_14 = arith.constant 0 : index
    %c0_15 = arith.constant 0 : index
    %23 = vector.load %arg7[%c0_14, %c0_15] : memref<1x128xf32, #tpu.memory_space<vmem>>, vector<1x128xf32>
    %24 = vector.broadcast %23 : vector<1x128xf32> to vector<8x128xf32>
    %25 = arith.addf %22, %24 : vector<8x128xf32>
    %26 = math.tanh %25 : vector<8x128xf32>
    %27 = arith.subf %26, %1 : vector<8x128xf32>
    %28 = arith.mulf %16, %27 : vector<8x128xf32>
    %29 = arith.addf %1, %28 : vector<8x128xf32>
    %c0_16 = arith.constant 0 : index
    %c0_17 = arith.constant 0 : index
    %30 = vector.load %arg8[%c0_16, %c0_17] : memref<8x128xf32, #tpu.memory_space<vmem>>, vector<8x128xf32>
    tpu.vector_store %arg8[%c0_16, %c0_17], %29 {strides = array<i32>} : memref<8x128xf32, #tpu.memory_space<vmem>>, vector<8x128xf32>,
    return
  }
  func.func @transform_0(%arg0: i32) -> (i32, i32) {
    %c0_i32 = arith.constant 0 : i32
    %c0_i32_0 = arith.constant 0 : i32
    return %arg0, %c0_i32 : i32, i32
  }
  func.func @transform_1(%arg0: i32) -> (i32, i32) {
    %c0_i32 = arith.constant 0 : i32
    %c0_i32_0 = arith.constant 0 : i32
    return %arg0, %c0_i32 : i32, i32
  }
  func.func @transform_2(%arg0: i32) -> (i32, i32) {
    %c0_i32 = arith.constant 0 : i32
    %c0_i32_0 = arith.constant 0 : i32
    %c0_i32_1 = arith.constant 0 : i32
    return %c0_i32, %c0_i32_0 : i32, i32
  }
  func.func @transform_3(%arg0: i32) -> (i32, i32) {
    %c0_i32 = arith.constant 0 : i32
    %c0_i32_0 = arith.constant 0 : i32
    %c0_i32_1 = arith.constant 0 : i32
    return %c0_i32, %c0_i32_0 : i32, i32
  }
  func.func @transform_4(%arg0: i32) -> (i32, i32) {
    %c0_i32 = arith.constant 0 : i32
    %c0_i32_0 = arith.constant 0 : i32
    %c0_i32_1 = arith.constant 0 : i32
    return %c0_i32, %c0_i32_0 : i32, i32
  }
  func.func @transform_5(%arg0: i32) -> (i32, i32) {
    %c0_i32 = arith.constant 0 : i32
    %c0_i32_0 = arith.constant 0 : i32
    %c0_i32_1 = arith.constant 0 : i32
    return %c0_i32, %c0_i32_0 : i32, i32
  }
  func.func @transform_6(%arg0: i32) -> (i32, i32) {
    %c0_i32 = arith.constant 0 : i32
    %c0_i32_0 = arith.constant 0 : i32
    %c0_i32_1 = arith.constant 0 : i32
    return %c0_i32, %c0_i32_0 : i32, i32
  }
  func.func @transform_7(%arg0: i32) -> (i32, i32) {
    %c0_i32 = arith.constant 0 : i32
    %c0_i32_0 = arith.constant 0 : i32
    return %arg0, %c0_i32 : i32, i32
  }
}

</mosaic_0001>

<llo_original>
// kernel: tpu_custom_call.1
$region0: #{tpu_custom_call.1}
  #allocation0 [shape = 'u32[]', space=smem, size = 0x4, offset = 0x4, fixed_abs, tag = 'smem constant byte address 0x4 - core index']
  #allocation1 [shape = 'u32[144,128]{1,0:T(1,128)}', space=vmem, size = 0x12000, scoped, tag = 'internal scratch']
  %s0 = inlined_call_operand.hbm [shape: f32[8,16], index: 0, kind: input, shape index: {}]
  %s1 = inlined_call_operand.hbm [shape: f32[8,128], index: 1, kind: input, shape index: {}]
  %s2 = inlined_call_operand.hbm [shape: f32[16,384], index: 2, kind: input, shape index: {}]
  %s3 = inlined_call_operand.hbm [shape: f32[128,256], index: 3, kind: input, shape index: {}]
  %s4 = inlined_call_operand.hbm [shape: f32[128,128], index: 4, kind: input, shape index: {}]
  %s5 = inlined_call_operand.vmem [shape: f32[1,256], index: 5, kind: input, shape index: {}]
  %s6 = inlined_call_operand.vmem [shape: f32[1,128], index: 6, kind: input, shape index: {}]
  %s7 = inlined_call_operand.hbm [shape: f32[8,128], index: 7, kind: output, shape index: {}]
  %s8 = sld [smem:[#allocation0]]
  $region58: #{tpu_custom_call.1} parent=0
    _
  %s10 = ssub.s32 1, %s8
  %s11 = scalar_select 0, %s10, %s8
  $region1: #{tpu_custom_call.1} parent=0
    #allocation2 [shape = 'u8[4096]{0}', space=vmem, size = 0x1000, scoped, tag = 'input window, operand 0, single buffered']
    #allocation3 [shape = 's32[1]{0}', space=sflag, size = 0x4, scoped, tag = 'scoped memory for tpu_custom_call.1']
    #allocation4 [shape = 's32[1]{0}', space=sflag, size = 0x4, scoped, tag = 'scoped memory for tpu_custom_call.1']
    #allocation5 [shape = 'u8[4096]{0}', space=vmem, size = 0x1000, scoped, tag = 'input window, operand 1, single buffered']
    #allocation6 [shape = 's32[1]{0}', space=sflag, size = 0x4, scoped, tag = 'scoped memory for tpu_custom_call.1']
    #allocation7 [shape = 'u8[24576]{0}', space=vmem, size = 0x6000, scoped, tag = 'input window, operand 2, single buffered']
    #allocation8 [shape = 'u8[131072]{0}', space=vmem, size = 0x20000, scoped, tag = 'input window, operand 3, single buffered']
    #allocation9 [shape = 's32[1]{0}', space=sflag, size = 0x4, scoped, tag = 'scoped memory for tpu_custom_call.1']
    #allocation10 [shape = 'u8[65536]{0}', space=vmem, size = 0x10000, scoped, tag = 'input window, operand 4, single buffered']
    #allocation11 [shape = 'u8[4096]{0}', space=vmem, size = 0x1000, scoped, tag = 'output window, operand 0, single buffered']
    %12 = vsyncpa [#allocation3], 0
    %13 = vsyncpa [#allocation6], 0
    %14 = vsyncpa [#allocation9], 0
    %15 = vsyncpa [#allocation4], 0
    // Predicated region
    $region2: #{tpu_custom_call.1} parent=1 // pred_check
      _
    $region3: #{tpu_custom_call.1} parent=1 // pred_check_branch
      %17 = sbr.rel (0) target = $region5
    $region4: #{tpu_custom_call.1} parent=1 // pred_region
      %s19 = ssub.s32 128, 128
      %20 = vsyncadd [#allocation3], %s19
      %s22 = sshll.u32 [#allocation2], 4
      %s23 = int_to_ptr.vmem [resolvable:$true] %s22
      %25 = dma.hbm_to_vmem [thread:$0]  %s0, 128, %s23, [#allocation3]
    $region5: #{tpu_custom_call.1} parent=1 // pred_fallthru
      _
    // Predicated region
    $region6: #{tpu_custom_call.1} parent=1 // pred_check
      _
    $region7: #{tpu_custom_call.1} parent=1 // pred_check_branch
      %27 = sbr.rel (0) target = $region9
    $region8: #{tpu_custom_call.1} parent=1 // pred_region
      %s29 = ssub.s32 128, 128
      %30 = vsyncadd [#allocation6], %s29
      %s32 = sshll.u32 [#allocation5], 4
      %s33 = int_to_ptr.vmem [resolvable:$true] %s32
      %35 = dma.hbm_to_vmem [thread:$0]  %s1, 128, %s33, [#allocation6]
    $region9: #{tpu_custom_call.1} parent=1 // pred_fallthru
      _
    // Predicated region
    $region10: #{tpu_custom_call.1} parent=1 // pred_check
      _
    $region11: #{tpu_custom_call.1} parent=1 // pred_check_branch
      %37 = sbr.rel (0) target = $region13
    $region12: #{tpu_custom_call.1} parent=1 // pred_region
      %s39 = ssub.s32 768, 768
      %40 = vsyncadd [#allocation6], %s39
      %s41 = sshll.u32 [#allocation7], 4
      %s42 = int_to_ptr.vmem [resolvable:$true] %s41
      %47 = dma.hbm_to_vmem [thread:$0]  %s2, 768, %s42, [#allocation6], 384, 384, 24
    $region13: #{tpu_custom_call.1} parent=1 // pred_fallthru
      _
    // Predicated region
    $region14: #{tpu_custom_call.1} parent=1 // pred_check
      _
    $region15: #{tpu_custom_call.1} parent=1 // pred_check_branch
      %49 = sbr.rel (0) target = $region17
    $region16: #{tpu_custom_call.1} parent=1 // pred_region
      %s51 = ssub.s32 4096, 4096
      %52 = vsyncadd [#allocation9], %s51
      %s53 = sshll.u32 [#allocation8], 4
      %s54 = int_to_ptr.vmem [resolvable:$true] %s53
      %59 = dma.hbm_to_vmem [thread:$0]  %s3, 4096, %s54, [#allocation9], 256, 256, 16
    $region17: #{tpu_custom_call.1} parent=1 // pred_fallthru
      _
    // Predicated region
    $region18: #{tpu_custom_call.1} parent=1 // pred_check
      _
    $region19: #{tpu_custom_call.1} parent=1 // pred_check_branch
      %61 = sbr.rel (0) target = $region21
    $region20: #{tpu_custom_call.1} parent=1 // pred_region
      %s63 = ssub.s32 2048, 2048
      %64 = vsyncadd [#allocation9], %s63
      %s65 = sshll.u32 [#allocation10], 4
      %s66 = int_to_ptr.vmem [resolvable:$true] %s65
      %71 = dma.hbm_to_vmem [thread:$0]  %s4, 2048, %s66, [#allocation9], 128, 128, 8
    $region21: #{tpu_custom_call.1} parent=1 // pred_fallthru
      _
    // Predicated region
    $region22: #{tpu_custom_call.1} parent=1 // pred_check
      _
    $region23: #{tpu_custom_call.1} parent=1 // pred_check_branch
      %73 = sbr.rel (0) target = $region25
    $region24: #{tpu_custom_call.1} parent=1 // pred_region
      _
    $region25: #{tpu_custom_call.1} parent=1 // pred_fallthru
      _
    // Predicated region
    $region26: #{tpu_custom_call.1} parent=1 // pred_check
      _
    $region27: #{tpu_custom_call.1} parent=1 // pred_check_branch
      %75 = sbr.rel (0) target = $region29
    $region28: #{tpu_custom_call.1} parent=1 // pred_region
      _
    $region29: #{tpu_custom_call.1} parent=1 // pred_fallthru
      _
    // Predicated region
    $region30: #{tpu_custom_call.1} parent=1 // pred_check
      _
    $region31: #{tpu_custom_call.1} parent=1 // pred_check_branch
      %77 = sbr.rel (0) target = $region33
    $region32: #{tpu_custom_call.1} parent=1 // pred_region
      %78 = dma.done [#allocation3], 128
    $region33: #{tpu_custom_call.1} parent=1 // pred_fallthru
      _
    // Predicated region
    $region34: #{tpu_custom_call.1} parent=1 // pred_check
      _
    $region35: #{tpu_custom_call.1} parent=1 // pred_check_branch
      %80 = sbr.rel (0) target = $region37
    $region36: #{tpu_custom_call.1} parent=1 // pred_region
      %81 = dma.done [#allocation6], 128
    $region37: #{tpu_custom_call.1} parent=1 // pred_fallthru
      _
    // Predicated region
    $region38: #{tpu_custom_call.1} parent=1 // pred_check
      _
    $region39: #{tpu_custom_call.1} parent=1 // pred_check_branch
      %83 = sbr.rel (0) target = $region41
    $region40: #{tpu_custom_call.1} parent=1 // pred_region
      %84 = dma.done [#allocation6], 768
    $region41: #{tpu_custom_call.1} parent=1 // pred_fallthru
      _
    // Predicated region
    $region42: #{tpu_custom_call.1} parent=1 // pred_check
      _
    $region43: #{tpu_custom_call.1} parent=1 // pred_check_branch
      %86 = sbr.rel (0) target = $region45
    $region44: #{tpu_custom_call.1} parent=1 // pred_region
      %87 = dma.done [#allocation9], 4096
    $region45: #{tpu_custom_call.1} parent=1 // pred_fallthru
      _
    // Predicated region
    $region46: #{tpu_custom_call.1} parent=1 // pred_check
      _
    $region47: #{tpu_custom_call.1} parent=1 // pred_check_branch
      %89 = sbr.rel (0) target = $region49
    $region48: #{tpu_custom_call.1} parent=1 // pred_region
      %90 = dma.done [#allocation9], 2048
    $region49: #{tpu_custom_call.1} parent=1 // pred_fallthru
      _
    %v91 = vld [vmem:[#allocation2] sm:$0xff]
    %v92 = vld [vmem:[#allocation5] sm:$0xff]
    %v93 = vld [vmem:[#allocation7] sm:$0xff]
    %v94 = vld [vmem:[#allocation7 + $0x8] sm:$0xff]
    %v95 = vld [vmem:[#allocation7 + $0x10] sm:$0xff]
    %v96 = vld [vmem:[#allocation7 + $0x18] sm:$0xff]
    %v97 = vld [vmem:[#allocation7 + $0x20] sm:$0xff]
    %v98 = vld [vmem:[#allocation7 + $0x28] sm:$0xff]
    %vm99 = vcmask 130048
    %v101 = vsel %vm99, %v91, 0
    %103 = vmatprep.subr.mxu0 %v94
    %104 = vmatpush1.msra.mxu0 %v93
    %105 = vmatprep.subr.mxu0 %v97
    %106 = vmatpush1.msra.mxu0 %v96
    %107 = vmatprep.subr.mxu0 0.0
    %108 = vmatpush1.msra.mxu0 0.0
    %109 = vmatprep.subr.mxu0 0.0
    %110 = vmatpush1.msra.mxu0 0.0
    %111 = vmatprep.subr.mxu0 0.0
    %112 = vmatpush1.msra.mxu0 0.0
    %113 = vmatprep.subr.mxu0 0.0
    %114 = vmatpush1.msra.mxu0 0.0
    %115 = vmatprep.subr.mxu0 0.0
    %116 = vmatpush1.msra.mxu0 0.0
    %117 = vmatprep.subr.mxu0 0.0
    %118 = vmatpush1.msra.mxu0 0.0
    %119 = vmatprep.subr.mxu0 0.0
    %120 = vmatpush1.msra.mxu0 0.0
    %121 = vmatprep.subr.mxu0 0.0
    %122 = vmatpush1.msra.mxu0 0.0
    %123 = vmatprep.subr.mxu0 0.0
    %124 = vmatpush1.msra.mxu0 0.0
    %125 = vmatprep.subr.mxu0 0.0
    %126 = vmatpush1.msra.mxu0 0.0
    %127 = vmatprep.subr.mxu0 0.0
    %128 = vmatpush1.msra.mxu0 0.0
    %129 = vmatprep.subr.mxu0 0.0
    %130 = vmatpush1.msra.mxu0 0.0
    %131 = vmatprep.subr.mxu0 0.0
    %132 = vmatpush1.msra.mxu0 0.0
    %133 = vmatprep.subr.mxu0 0.0
    %134 = vmatpush1.msra.mxu0 0.0
    %135 = vmatprep.subr.mxu0 0.0
    %136 = vmatpush1.msra.mxu0 0.0
    %137 = vmatprep.subr.mxu0 0.0
    %138 = vmatpush1.msra.mxu0 0.0
    %139 = vmatprep.subr.mxu0 0.0
    %140 = vmatpush1.msra.mxu0 0.0
    %141 = vmatprep.subr.mxu0 0.0
    %142 = vmatpush1.msra.mxu0 0.0
    %143 = vmatprep.subr.mxu0 0.0
    %144 = vmatpush1.msra.mxu0 0.0
    %145 = vmatprep.subr.mxu0 0.0
    %146 = vmatpush1.msra.mxu0 0.0
    %147 = vmatprep.subr.mxu0 0.0
    %148 = vmatpush1.msra.mxu0 0.0
    %149 = vmatprep.subr.mxu0 0.0
    %150 = vmatpush1.msra.mxu0 0.0
    %151 = vmatprep.subr.mxu0 0.0
    %152 = vmatpush1.msra.mxu0 0.0
    %153 = vmatprep.subr.mxu0 0.0
    %154 = vmatpush1.msra.mxu0 0.0
    %155 = vmatprep.subr.mxu0 0.0
    %156 = vmatpush1.msra.mxu0 0.0
    %157 = vmatprep.subr.mxu0 0.0
    %158 = vmatpush1.msra.mxu0 0.0
    %159 = vmatprep.subr.mxu0 0.0
    %160 = vmatpush1.msra.mxu0 0.0
    %161 = vmatprep.subr.mxu0 0.0
    %162 = vmatpush1.msra.mxu0 0.0
    %163 = vmatprep.subr.mxu0 0.0
    %164 = vmatpush1.msra.mxu0 0.0
    %165 = vmatprep.subr.mxu0 0.0
    %166 = vmatpush1.msra.mxu0 0.0
    %167 = vmatprep.mubr.f32.mxu0 0.0
    %168 = vmatmul.mubr.f32.gmra.mrb[0].mxu0 %v101
    %v169 = vpop.f32.mrb[0].mxu0
    %v170 = vadd.f32 0.0, %v169
    %v171 = vpop.f32.mrb[0].mxu0
    %v172 = vadd.f32 0.0, %v171
    %173 = vdwg.mxu0
    %174 = vmatprep.subr.mxu0 0.0
    %175 = vmatpush1.msra.mxu0 %v95
    %176 = vmatprep.subr.mxu0 0.0
    %177 = vmatpush1.msra.mxu0 %v98
    %178 = vmatprep.subr.mxu0 0.0
    %179 = vmatpush1.msra.mxu0 0.0
    %180 = vmatprep.subr.mxu0 0.0
    %181 = vmatpush1.msra.mxu0 0.0
    %182 = vmatprep.subr.mxu0 0.0
    %183 = vmatpush1.msra.mxu0 0.0
    %184 = vmatprep.subr.mxu0 0.0
    %185 = vmatpush1.msra.mxu0 0.0
    %186 = vmatprep.subr.mxu0 0.0
    %187 = vmatpush1.msra.mxu0 0.0
    %188 = vmatprep.subr.mxu0 0.0
    %189 = vmatpush1.msra.mxu0 0.0
    %190 = vmatprep.subr.mxu0 0.0
    %191 = vmatpush1.msra.mxu0 0.0
    %192 = vmatprep.subr.mxu0 0.0
    %193 = vmatpush1.msra.mxu0 0.0
    %194 = vmatprep.subr.mxu0 0.0
    %195 = vmatpush1.msra.mxu0 0.0
    %196 = vmatprep.subr.mxu0 0.0
    %197 = vmatpush1.msra.mxu0 0.0
    %198 = vmatprep.subr.mxu0 0.0
    %199 = vmatpush1.msra.mxu0 0.0
    %200 = vmatprep.subr.mxu0 0.0
    %201 = vmatpush1.msra.mxu0 0.0
    %202 = vmatprep.subr.mxu0 0.0
    %203 = vmatpush1.msra.mxu0 0.0
    %204 = vmatprep.subr.mxu0 0.0
    %205 = vmatpush1.msra.mxu0 0.0
    %206 = vmatprep.subr.mxu0 0.0
    %207 = vmatpush1.msra.mxu0 0.0
    %208 = vmatprep.subr.mxu0 0.0
    %209 = vmatpush1.msra.mxu0 0.0
    %210 = vmatprep.subr.mxu0 0.0
    %211 = vmatpush1.msra.mxu0 0.0
    %212 = vmatprep.subr.mxu0 0.0
    %213 = vmatpush1.msra.mxu0 0.0
    %214 = vmatprep.subr.mxu0 0.0
    %215 = vmatpush1.msra.mxu0 0.0
    %216 = vmatprep.subr.mxu0 0.0
    %217 = vmatpush1.msra.mxu0 0.0
    %218 = vmatprep.subr.mxu0 0.0
    %219 = vmatpush1.msra.mxu0 0.0
    %220 = vmatprep.subr.mxu0 0.0
    %221 = vmatpush1.msra.mxu0 0.0
    %222 = vmatprep.subr.mxu0 0.0
    %223 = vmatpush1.msra.mxu0 0.0
    %224 = vmatprep.subr.mxu0 0.0
    %225 = vmatpush1.msra.mxu0 0.0
    %226 = vmatprep.subr.mxu0 0.0
    %227 = vmatpush1.msra.mxu0 0.0
    %228 = vmatprep.subr.mxu0 0.0
    %229 = vmatpush1.msra.mxu0 0.0
    %230 = vmatprep.subr.mxu0 0.0
    %231 = vmatpush1.msra.mxu0 0.0
    %232 = vmatprep.subr.mxu0 0.0
    %233 = vmatpush1.msra.mxu0 0.0
    %234 = vmatprep.subr.mxu0 0.0
    %235 = vmatpush1.msra.mxu0 0.0
    %236 = vmatprep.subr.mxu0 0.0
    %237 = vmatpush1.msra.mxu0 0.0
    %238 = vmatprep.mubr.f32.mxu0 0.0
    %239 = vmatmul.mubr.f32.gmra.mrb[0].mxu0 %v101
    %v240 = vpop.f32.mrb[0].mxu0
    %v241 = vadd.f32 0.0, %v240
    %v242 = vpop.f32.mrb[0].mxu0
    %243 = vdwg.mxu0
    %v244 = vld [vmem:[#allocation8] sm:$0xff]
    %v245 = vld [vmem:[#allocation8 + $0x8] sm:$0xff]
    %v246 = vld [vmem:[#allocation8 + $0x10] sm:$0xff]
    %v247 = vld [vmem:[#allocation8 + $0x18] sm:$0xff]
    %v248 = vld [vmem:[#allocation8 + $0x20] sm:$0xff]
    %v249 = vld [vmem:[#allocation8 + $0x28] sm:$0xff]
    %v250 = vld [vmem:[#allocation8 + $0x30] sm:$0xff]
    %v251 = vld [vmem:[#allocation8 + $0x38] sm:$0xff]
    %v252 = vld [vmem:[#allocation8 + $0x40] sm:$0xff]
    %v253 = vld [vmem:[#allocation8 + $0x48] sm:$0xff]
    %v254 = vld [vmem:[#allocation8 + $0x50] sm:$0xff]
    %v255 = vld [vmem:[#allocation8 + $0x58] sm:$0xff]
    %v256 = vld [vmem:[#allocation8 + $0x60] sm:$0xff]
    %v257 = vld [vmem:[#allocation8 + $0x68] sm:$0xff]
    %v258 = vld [vmem:[#allocation8 + $0x70] sm:$0xff]
    %v259 = vld [vmem:[#allocation8 + $0x78] sm:$0xff]
    %v260 = vld [vmem:[#allocation8 + $0x80] sm:$0xff]
    %v261 = vld [vmem:[#allocation8 + $0x88] sm:$0xff]
    %v262 = vld [vmem:[#allocation8 + $0x90] sm:$0xff]
    %v263 = vld [vmem:[#allocation8 + $0x98] sm:$0xff]
    %v264 = vld [vmem:[#allocation8 + $0xa0] sm:$0xff]
    %v265 = vld [vmem:[#allocation8 + $0xa8] sm:$0xff]
    %v266 = vld [vmem:[#allocation8 + $0xb0] sm:$0xff]
    %v267 = vld [vmem:[#allocation8 + $0xb8] sm:$0xff]
    %v268 = vld [vmem:[#allocation8 + $0xc0] sm:$0xff]
    %v269 = vld [vmem:[#allocation8 + $0xc8] sm:$0xff]
    %v270 = vld [vmem:[#allocation8 + $0xd0] sm:$0xff]
    %v271 = vld [vmem:[#allocation8 + $0xd8] sm:$0xff]
    %v272 = vld [vmem:[#allocation8 + $0xe0] sm:$0xff]
    %v273 = vld [vmem:[#allocation8 + $0xe8] sm:$0xff]
    %v274 = vld [vmem:[#allocation8 + $0xf0] sm:$0xff]
    %v275 = vld [vmem:[#allocation8 + $0xf8] sm:$0xff]
    %276 = vmatprep.subr.mxu0 %v245
    %277 = vmatpush1.msra.mxu0 %v244
    %278 = vmatprep.subr.mxu0 %v247
    %279 = vmatpush1.msra.mxu0 %v246
    %280 = vmatprep.subr.mxu0 %v249
    %281 = vmatpush1.msra.mxu0 %v248
    %282 = vmatprep.subr.mxu0 %v251
    %283 = vmatpush1.msra.mxu0 %v250
    %284 = vmatprep.subr.mxu0 %v253
    %285 = vmatpush1.msra.mxu0 %v252
    %286 = vmatprep.subr.mxu0 %v255
    %287 = vmatpush1.msra.mxu0 %v254
    %288 = vmatprep.subr.mxu0 %v257
    %289 = vmatpush1.msra.mxu0 %v256
    %290 = vmatprep.subr.mxu0 %v259
    %291 = vmatpush1.msra.mxu0 %v258
    %292 = vmatprep.subr.mxu0 %v261
    %293 = vmatpush1.msra.mxu0 %v260
    %294 = vmatprep.subr.mxu0 %v263
    %295 = vmatpush1.msra.mxu0 %v262
    %296 = vmatprep.subr.mxu0 %v265
    %297 = vmatpush1.msra.mxu0 %v264
    %298 = vmatprep.subr.mxu0 %v267
    %299 = vmatpush1.msra.mxu0 %v266
    %300 = vmatprep.subr.mxu0 %v269
    %301 = vmatpush1.msra.mxu0 %v268
    %302 = vmatprep.subr.mxu0 %v271
    %303 = vmatpush1.msra.mxu0 %v270
    %304 = vmatprep.subr.mxu0 %v273
    %305 = vmatpush1.msra.mxu0 %v272
    %306 = vmatprep.subr.mxu0 %v275
    %307 = vmatpush1.msra.mxu0 %v274
    %308 = vmatprep.subr.mxu0 0.0
    %309 = vmatpush1.msra.mxu0 0.0
    %310 = vmatprep.subr.mxu0 0.0
    %311 = vmatpush1.msra.mxu0 0.0
    %312 = vmatprep.subr.mxu0 0.0
    %313 = vmatpush1.msra.mxu0 0.0
    %314 = vmatprep.subr.mxu0 0.0
    %315 = vmatpush1.msra.mxu0 0.0
    %316 = vmatprep.subr.mxu0 0.0
    %317 = vmatpush1.msra.mxu0 0.0
    %318 = vmatprep.subr.mxu0 0.0
    %319 = vmatpush1.msra.mxu0 0.0
    %320 = vmatprep.subr.mxu0 0.0
    %321 = vmatpush1.msra.mxu0 0.0
    %322 = vmatprep.subr.mxu0 0.0
    %323 = vmatpush1.msra.mxu0 0.0
    %324 = vmatprep.subr.mxu0 0.0
    %325 = vmatpush1.msra.mxu0 0.0
    %326 = vmatprep.subr.mxu0 0.0
    %327 = vmatpush1.msra.mxu0 0.0
    %328 = vmatprep.subr.mxu0 0.0
    %329 = vmatpush1.msra.mxu0 0.0
    %330 = vmatprep.subr.mxu0 0.0
    %331 = vmatpush1.msra.mxu0 0.0
    %332 = vmatprep.subr.mxu0 0.0
    %333 = vmatpush1.msra.mxu0 0.0
    %334 = vmatprep.subr.mxu0 0.0
    %335 = vmatpush1.msra.mxu0 0.0
    %336 = vmatprep.subr.mxu0 0.0
    %337 = vmatpush1.msra.mxu0 0.0
    %338 = vmatprep.subr.mxu0 0.0
    %339 = vmatpush1.msra.mxu0 0.0
    %340 = vmatprep.mubr.f32.mxu0 0.0
    %341 = vmatmul.mubr.f32.gmra.mrb[0].mxu0 %v92
    %v342 = vpop.f32.mrb[0].mxu0
    %v343 = vadd.f32 0.0, %v342
    %v344 = vpop.f32.mrb[0].mxu0
    %v345 = vadd.f32 0.0, %v344
    %346 = vdwg.mxu0
    %v347 = vadd.f32 %v170, %v343
    %v348 = vadd.f32 %v172, %v345
    %v349 = vld [vmem:[%s5] sm:$0x3]
    %v351 = vlaneseq
    %v352 = vshrl.u32 %v351, 7
    %v353 = vsub.s32 0, %v352
    %v354 = vrot.slane %v349, %v353
    %v355 = vlaneseq
    %v356 = vshrl.u32 %v355, 7
    %v357 = vsub.s32 1, %v356
    %v358 = vrot.slane %v349, %v357
    %v361 = vadd.f32 %v347, %v354
    %v362 = vadd.f32 %v348, %v358
    %v363 = vxor.u32 %v361, 2147483648
    %v364 = vxor.u32 %v362, 2147483648
    %v365 = vmul.f32 %v363, 1.442695
    %v366 = vpow.pop %v365
    %v367 = vmul.f32 %v364, 1.442695
    %v368 = vpow.pop %v367
    %v369 = vadd.f32 %v366, 1.0
    %v370 = vadd.f32 %v368, 1.0
    %v371 = vrcp.pop %v369
    %v372 = vmul.f32 1.0, %v371
    %v373 = vrcp.pop %v370
    %v374 = vmul.f32 1.0, %v373
    %v375 = vmul.f32 %v374, %v92
    %v376 = vld [vmem:[#allocation10] sm:$0xff]
    %v377 = vld [vmem:[#allocation10 + $0x8] sm:$0xff]
    %v378 = vld [vmem:[#allocation10 + $0x10] sm:$0xff]
    %v379 = vld [vmem:[#allocation10 + $0x18] sm:$0xff]
    %v380 = vld [vmem:[#allocation10 + $0x20] sm:$0xff]
    %v381 = vld [vmem:[#allocation10 + $0x28] sm:$0xff]
    %v382 = vld [vmem:[#allocation10 + $0x30] sm:$0xff]
    %v383 = vld [vmem:[#allocation10 + $0x38] sm:$0xff]
    %v384 = vld [vmem:[#allocation10 + $0x40] sm:$0xff]
    %v385 = vld [vmem:[#allocation10 + $0x48] sm:$0xff]
    %v386 = vld [vmem:[#allocation10 + $0x50] sm:$0xff]
    %v387 = vld [vmem:[#allocation10 + $0x58] sm:$0xff]
    %v388 = vld [vmem:[#allocation10 + $0x60] sm:$0xff]
    %v389 = vld [vmem:[#allocation10 + $0x68] sm:$0xff]
    %v390 = vld [vmem:[#allocation10 + $0x70] sm:$0xff]
    %v391 = vld [vmem:[#allocation10 + $0x78] sm:$0xff]
    %392 = vmatprep.subr.mxu0 0.0
    %393 = vmatpush1.msra.mxu0 %v376
    %394 = vmatprep.subr.mxu0 0.0
    %395 = vmatpush1.msra.mxu0 %v377
    %396 = vmatprep.subr.mxu0 0.0
    %397 = vmatpush1.msra.mxu0 %v378
    %398 = vmatprep.subr.mxu0 0.0
    %399 = vmatpush1.msra.mxu0 %v379
    %400 = vmatprep.subr.mxu0 0.0
    %401 = vmatpush1.msra.mxu0 %v380
    %402 = vmatprep.subr.mxu0 0.0
    %403 = vmatpush1.msra.mxu0 %v381
    %404 = vmatprep.subr.mxu0 0.0
    %405 = vmatpush1.msra.mxu0 %v382
    %406 = vmatprep.subr.mxu0 0.0
    %407 = vmatpush1.msra.mxu0 %v383
    %408 = vmatprep.subr.mxu0 0.0
    %409 = vmatpush1.msra.mxu0 %v384
    %410 = vmatprep.subr.mxu0 0.0
    %411 = vmatpush1.msra.mxu0 %v385
    %412 = vmatprep.subr.mxu0 0.0
    %413 = vmatpush1.msra.mxu0 %v386
    %414 = vmatprep.subr.mxu0 0.0
    %415 = vmatpush1.msra.mxu0 %v387
    %416 = vmatprep.subr.mxu0 0.0
    %417 = vmatpush1.msra.mxu0 %v388
    %418 = vmatprep.subr.mxu0 0.0
    %419 = vmatpush1.msra.mxu0 %v389
    %420 = vmatprep.subr.mxu0 0.0
    %421 = vmatpush1.msra.mxu0 %v390
    %422 = vmatprep.subr.mxu0 0.0
    %423 = vmatpush1.msra.mxu0 %v391
    %424 = vmatprep.subr.mxu0 0.0
    %425 = vmatpush1.msra.mxu0 0.0
    %426 = vmatprep.subr.mxu0 0.0
    %427 = vmatpush1.msra.mxu0 0.0
    %428 = vmatprep.subr.mxu0 0.0
    %429 = vmatpush1.msra.mxu0 0.0
    %430 = vmatprep.subr.mxu0 0.0
    %431 = vmatpush1.msra.mxu0 0.0
    %432 = vmatprep.subr.mxu0 0.0
    %433 = vmatpush1.msra.mxu0 0.0
    %434 = vmatprep.subr.mxu0 0.0
    %435 = vmatpush1.msra.mxu0 0.0
    %436 = vmatprep.subr.mxu0 0.0
    %437 = vmatpush1.msra.mxu0 0.0
    %438 = vmatprep.subr.mxu0 0.0
    %439 = vmatpush1.msra.mxu0 0.0
    %440 = vmatprep.subr.mxu0 0.0
    %441 = vmatpush1.msra.mxu0 0.0
    %442 = vmatprep.subr.mxu0 0.0
    %443 = vmatpush1.msra.mxu0 0.0
    %444 = vmatprep.subr.mxu0 0.0
    %445 = vmatpush1.msra.mxu0 0.0
    %446 = vmatprep.subr.mxu0 0.0
    %447 = vmatpush1.msra.mxu0 0.0
    %448 = vmatprep.subr.mxu0 0.0
    %449 = vmatpush1.msra.mxu0 0.0
    %450 = vmatprep.subr.mxu0 0.0
    %451 = vmatpush1.msra.mxu0 0.0
    %452 = vmatprep.subr.mxu0 0.0
    %453 = vmatpush1.msra.mxu0 0.0
    %454 = vmatprep.subr.mxu0 0.0
    %455 = vmatpush1.msra.mxu0 0.0
    %456 = vmatprep.mubr.f32.mxu0 0.0
    %457 = vmatmul.mubr.f32.gmra.mrb[0].mxu0 %v375
    %v458 = vpop.f32.mrb[0].mxu0
    %v459 = vadd.f32 0.0, %v458
    %v460 = vpop.f32.mrb[0].mxu0
    %461 = vdwg.mxu0
    %v462 = vadd.f32 %v241, %v459
    %v463 = vld [vmem:[%s6] sm:$0x1]
    %v465 = vlaneseq
    %v466 = vshrl.u32 %v465, 7
    %v467 = vsub.s32 0, %v466
    %v468 = vrot.slane %v463, %v467
    %v470 = vadd.f32 %v462, %v468
    %v471 = vtanh.pop %v470
    %v472 = vsub.f32 %v471, %v92
    %v473 = vmul.f32 %v372, %v472
    %v474 = vadd.f32 %v92, %v473
    %475 = vst [vmem:[#allocation11] sm:$0xff] %v474
    // Predicated region
    $region50: #{tpu_custom_call.1} parent=1 // pred_check
      _
    $region51: #{tpu_custom_call.1} parent=1 // pred_check_branch
      %477 = sbr.rel (0) target = $region53
    $region52: #{tpu_custom_call.1} parent=1 // pred_region
      %s479 = ssub.s32 128, 128
      %480 = vsyncadd [#allocation4], %s479
      %s482 = sshll.u32 [#allocation11], 4
      %s483 = int_to_ptr.vmem [resolvable:$true] %s482
      %485 = dma.vmem_to_hbm [thread:$0]  %s483, 128, %s7, [#allocation4]
    $region53: #{tpu_custom_call.1} parent=1 // pred_fallthru
      _
    // Predicated region
    $region54: #{tpu_custom_call.1} parent=1 // pred_check
      _
    $region55: #{tpu_custom_call.1} parent=1 // pred_check_branch
      %487 = sbr.rel (0) target = $region57
    $region56: #{tpu_custom_call.1} parent=1 // pred_region
      %488 = dma.done [#allocation4], 128
    $region57: #{tpu_custom_call.1} parent=1 // pred_fallthru
      _
    %489 = vsyncpa [#allocation3], 1
    %490 = vsyncpa [#allocation6], 1
    %491 = vsyncpa [#allocation9], 1
    %492 = vsyncpa [#allocation4], 1

</llo_original>
